<compile_context>
chip_gen: v7x
topology: tpu7x:2x2x1
jax: 0.10.0
libtpu: 0.0.40
codegen_flags: <defaults>
</compile_context>

<pallas_src>
import functools

import jax
import jax.numpy as jnp
from jax import lax
from jax.experimental import pallas as pl
from jax.experimental.pallas import tpu as pltpu

LANES = 128
SUBLANES = 8
MIN_BLOCK_ELEMS = SUBLANES * LANES           # 1024 = one (8,128) f32 vreg tile
MAX_BLOCK_ROWS = 2048                        # (2048,128) f32 = 1 MiB / input / buffer
MAX_BLOCK_ELEMS = MAX_BLOCK_ROWS * LANES     # 262144 elements


def _focal_terms(p, t, alpha, gamma, gamma_int):
    """Elementwise focal-loss map (matches F.binary_cross_entropy semantics)."""
    # PyTorch clamps the log terms at -100.
    log_p = jnp.maximum(jnp.log(p), -100.0)
    log_1mp = jnp.maximum(jnp.log(1.0 - p), -100.0)
    bce = -(t * log_p + (1.0 - t) * log_1mp)
    p_t = jnp.exp(-bce)
    one_m_pt = 1.0 - p_t
    if gamma_int is not None:
        focal = lax.integer_pow(one_m_pt, gamma_int)   # VPU multiplies, no EUP pow
    else:
        focal = one_m_pt ** gamma
    alpha_w = alpha * t + (1.0 - alpha) * (1.0 - t)
    return alpha_w * focal * bce


def _focal_sum_kernel(inp_ref, tgt_ref, out_ref, *, alpha, gamma, gamma_int):
    p = inp_ref[...].astype(jnp.float32)
    t = tgt_ref[...].astype(jnp.float32)
    loss = _focal_terms(p, t, alpha, gamma, gamma_int)
    # Fold this block's rows into a single (8,128) vreg of partial sums:
    # pure VPU adds (no XLU), hidden under the input DMA.  Final tiny
    # cross-lane reduce happens once in the wrapper.
    out_ref[...] = jnp.sum(loss.reshape(-1, SUBLANES, LANES), axis=0)


def _focal_map_kernel(inp_ref, tgt_ref, out_ref, *, alpha, gamma, gamma_int):
    p = inp_ref[...].astype(jnp.float32)
    t = tgt_ref[...].astype(jnp.float32)
    out_ref[...] = _focal_terms(p, t, alpha, gamma, gamma_int)


def _split_plan(n):
    """Pick (num_blocks, block_rows, n_main) for the vreg-aligned prefix."""
    if n >= MAX_BLOCK_ELEMS:
        block_elems = MAX_BLOCK_ELEMS
    else:
        block_elems = (n // MIN_BLOCK_ELEMS) * MIN_BLOCK_ELEMS
    if block_elems == 0:
        return 0, 0, 0
    num_blocks = n // block_elems
    return num_blocks, block_elems // LANES, num_blocks * block_elems


def focal_loss(inputs, targets, alpha=1.0, gamma=2.0, reduction="mean"):
    """Pallas TPU implementation of FocalLoss.forward ('mean'/'sum'/'none')."""
    assert inputs.shape == targets.shape
    if reduction not in ("mean", "sum", "none"):
        raise ValueError(f"unknown reduction: {reduction!r}")

    n = inputs.size
    alpha = float(alpha)
    gamma = float(gamma)
    gamma_int = int(gamma) if (gamma.is_integer() and 0.0 <= gamma <= 8.0) else None

    # Native-dtype flatten; the kernel upcasts in VMEM, so no wrapper-side
    # full-array cast (keeps HBM traffic minimal for bf16 / int targets).
    flat_p = jnp.ravel(inputs)
    flat_t = jnp.ravel(targets)

    num_blocks, block_rows, n_main = _split_plan(n)
    tail = n - n_main

    dims_sem = pltpu.CompilerParams(dimension_semantics=("parallel",))
    in_bytes = inputs.dtype.itemsize + targets.dtype.itemsize

    if reduction == "none":
        pieces = []
        if num_blocks > 0:
            rows_main = n_main // LANES
            p2d = (flat_p if tail == 0 else flat_p[:n_main]).reshape(rows_main, LANES)
            t2d = (flat_t if tail == 0 else flat_t[:n_main]).reshape(rows_main, LANES)
            kernel = functools.partial(
                _focal_map_kernel, alpha=alpha, gamma=gamma, gamma_int=gamma_int
            )
            loss_main = pl.pallas_call(
                kernel,
                out_shape=jax.ShapeDtypeStruct((rows_main, LANES), jnp.float32),
                grid=(num_blocks,),
                in_specs=[
                    pl.BlockSpec((block_rows, LANES), lambda i: (i, 0)),
                    pl.BlockSpec((block_rows, LANES), lambda i: (i, 0)),
                ],
                out_specs=pl.BlockSpec((block_rows, LANES), lambda i: (i, 0)),
                compiler_params=dims_sem,
                cost_estimate=pl.CostEstimate(
                    flops=12 * n_main,
                    transcendentals=3 * n_main,
                    bytes_accessed=n_main * (in_bytes + 4),
                ),
            )(p2d, t2d)
            pieces.append(loss_main.reshape(-1))
        if tail > 0:
            p_tail = flat_p[n_main:].astype(jnp.float32)
            t_tail = flat_t[n_main:].astype(jnp.float32)
            pieces.append(_focal_terms(p_tail, t_tail, alpha, gamma, gamma_int))
        flat_loss = pieces[0] if len(pieces) == 1 else jnp.concatenate(pieces)
        return flat_loss.reshape(inputs.shape)

    # 'mean' / 'sum'
    total = jnp.float32(0.0)

    if num_blocks > 0:
        rows_main = n_main // LANES
        p2d = (flat_p if tail == 0 else flat_p[:n_main]).reshape(rows_main, LANES)
        t2d = (flat_t if tail == 0 else flat_t[:n_main]).reshape(rows_main, LANES)

        kernel = functools.partial(
            _focal_sum_kernel, alpha=alpha, gamma=gamma, gamma_int=gamma_int
        )
        out_rows = num_blocks * SUBLANES
        partials = pl.pallas_call(
            kernel,
            out_shape=jax.ShapeDtypeStruct((out_rows, LANES), jnp.float32),
            grid=(num_blocks,),
            in_specs=[
                pl.BlockSpec((block_rows, LANES), lambda i: (i, 0)),
                pl.BlockSpec((block_rows, LANES), lambda i: (i, 0)),
            ],
            out_specs=pl.BlockSpec((SUBLANES, LANES), lambda i: (i, 0)),
            compiler_params=dims_sem,
            cost_estimate=pl.CostEstimate(
                flops=12 * n_main,
                transcendentals=3 * n_main,
                bytes_accessed=n_main * in_bytes + out_rows * LANES * 4,
            ),
        )(p2d, t2d)
        total = total + jnp.sum(partials)

    if tail > 0:
        p_tail = flat_p[n_main:].astype(jnp.float32)
        t_tail = flat_t[n_main:].astype(jnp.float32)
        total = total + jnp.sum(_focal_terms(p_tail, t_tail, alpha, gamma, gamma_int))

    if reduction == "mean":
        return total / jnp.float32(n)
    return total  # 'sum'


def _focal_loss_ref(inputs, targets, alpha=1.0, gamma=2.0, reduction="mean"):
    p = inputs.astype(jnp.float32)
    t = targets.astype(jnp.float32)
    bce = -(t * jnp.maximum(jnp.log(p), -100.0)
            + (1.0 - t) * jnp.maximum(jnp.log(1.0 - p), -100.0))
    p_t = jnp.exp(-bce)
    alpha_w = alpha * t + (1.0 - alpha) * (1.0 - t)
    loss = alpha_w * (1.0 - p_t) ** gamma * bce
    if reduction == "mean":
        return jnp.mean(loss)
    if reduction == "sum":
        return jnp.sum(loss)
    return loss


if __name__ == "__main__":
    key = jax.random.PRNGKey(0)
    k1, k2, k3, k4 = jax.random.split(key, 4)

    # Inputs are probabilities (the module applies binary_cross_entropy, not
    # *_with_logits); targets are binary labels.
    shape = (2, 4, 16, 16)
    inputs = jax.nn.sigmoid(jax.random.normal(k1, shape, dtype=jnp.float32))
    targets = (jax.random.uniform(k2, shape) > 0.5).astype(jnp.float32)

    out_mean = jax.block_until_ready(
        focal_loss(inputs, targets, alpha=1.0, gamma=2.0, reduction="mean"))
    ref_mean = _focal_loss_ref(inputs, targets, 1.0, 2.0, "mean")
    assert jnp.allclose(out_mean, ref_mean, rtol=1e-5, atol=1e-6), (out_mean, ref_mean)

    out_sum = jax.block_until_ready(
        focal_loss(inputs, targets, alpha=0.75, gamma=2.0, reduction="sum"))
    ref_sum = _focal_loss_ref(inputs, targets, 0.75, 2.0, "sum")
    assert jnp.allclose(out_sum, ref_sum, rtol=1e-5, atol=1e-5), (out_sum, ref_sum)

    out_none = jax.block_until_ready(
        focal_loss(inputs, targets, alpha=1.0, gamma=2.0, reduction="none"))
    ref_none = _focal_loss_ref(inputs, targets, 1.0, 2.0, "none")
    assert jnp.allclose(out_none, ref_none, rtol=1e-5, atol=1e-6)

    # Non-aligned size: exercises the vreg-aligned kernel prefix + jnp tail.
    shape2 = (3, 5, 7, 11)
    inputs2 = jax.nn.sigmoid(jax.random.normal(k3, shape2, dtype=jnp.float32))
    targets2 = (jax.random.uniform(k4, shape2) > 0.5).astype(jnp.float32)
    out2 = jax.block_until_ready(
        focal_loss(inputs2, targets2, alpha=1.0, gamma=2.0, reduction="mean"))
    ref2 = _focal_loss_ref(inputs2, targets2, 1.0, 2.0, "mean")
    assert jnp.allclose(out2, ref2, rtol=1e-5, atol=1e-6), (out2, ref2)

    print("KERNEL_OK")
</pallas_src>

<mosaic_0001>
module attributes {stable_mosaic.version = 11 : i64} {
  func.func @_focal_sum_kernel(%arg0: i32, %arg1: memref<16x128xf32, #tpu.memory_space<vmem>>, %arg2: memref<16x128xf32, #tpu.memory_space<vmem>>, %arg3: memref<8x128xf32, #tpu.memory_space<vmem>>) attributes {dimension_semantics = [#tpu.dimension_semantics<parallel>], iteration_bounds = array<i64: 1>, scalar_prefetch = 0 : i64, scratch_operands = 0 : i64, tpu.core_type = #tpu.core_type<tc>, window_params = [{transform_indices = @transform_0, window_bounds = array<i64: 16, 128>}, {transform_indices = @transform_1, window_bounds = array<i64: 16, 128>}, {transform_indices = @transform_2, window_bounds = array<i64: 8, 128>}]} {
    %c0 = arith.constant 0 : index
    %c0_0 = arith.constant 0 : index
    %0 = vector.load %arg1[%c0, %c0_0] : memref<16x128xf32, #tpu.memory_space<vmem>>, vector<16x128xf32>
    %c0_1 = arith.constant 0 : index
    %c0_2 = arith.constant 0 : index
    %1 = vector.load %arg2[%c0_1, %c0_2] : memref<16x128xf32, #tpu.memory_space<vmem>>, vector<16x128xf32>
    %2 = math.log %0 : vector<16x128xf32>
    %cst = arith.constant -1.000000e+02 : f32
    %3 = vector.broadcast %cst : f32 to vector<16x128xf32>
    %4 = arith.maximumf %2, %3 : vector<16x128xf32>
    %cst_3 = arith.constant 1.000000e+00 : f32
    %5 = vector.broadcast %cst_3 : f32 to vector<16x128xf32>
    %6 = arith.subf %5, %0 : vector<16x128xf32>
    %7 = math.log %6 : vector<16x128xf32>
    %cst_4 = arith.constant -1.000000e+02 : f32
    %8 = vector.broadcast %cst_4 : f32 to vector<16x128xf32>
    %9 = arith.maximumf %7, %8 : vector<16x128xf32>
    %10 = arith.mulf %1, %4 : vector<16x128xf32>
    %cst_5 = arith.constant 1.000000e+00 : f32
    %11 = vector.broadcast %cst_5 : f32 to vector<16x128xf32>
    %12 = arith.subf %11, %1 : vector<16x128xf32>
    %13 = arith.mulf %12, %9 : vector<16x128xf32>
    %14 = arith.addf %10, %13 : vector<16x128xf32>
    %cst_6 = arith.constant 0.000000e+00 : f32
    %15 = vector.broadcast %cst_6 : f32 to vector<16x128xf32>
    %16 = arith.subf %15, %14 : vector<16x128xf32>
    %cst_7 = arith.constant 0.000000e+00 : f32
    %17 = vector.broadcast %cst_7 : f32 to vector<16x128xf32>
    %18 = arith.subf %17, %16 : vector<16x128xf32>
    %19 = math.exp %18 : vector<16x128xf32>
    %cst_8 = arith.constant 1.000000e+00 : f32
    %20 = vector.broadcast %cst_8 : f32 to vector<16x128xf32>
    %21 = arith.subf %20, %19 : vector<16x128xf32>
    %22 = arith.mulf %21, %21 : vector<16x128xf32>
    %cst_9 = arith.constant 1.000000e+00 : f32
    %23 = vector.broadcast %cst_9 : f32 to vector<16x128xf32>
    %24 = arith.mulf %23, %1 : vector<16x128xf32>
    %cst_10 = arith.constant 1.000000e+00 : f32
    %25 = vector.broadcast %cst_10 : f32 to vector<16x128xf32>
    %26 = arith.subf %25, %1 : vector<16x128xf32>
    %cst_11 = arith.constant 0.000000e+00 : f32
    %27 = vector.broadcast %cst_11 : f32 to vector<16x128xf32>
    %28 = arith.mulf %27, %26 : vector<16x128xf32>
    %29 = arith.addf %24, %28 : vector<16x128xf32>
    %30 = arith.mulf %29, %22 : vector<16x128xf32>
    %31 = arith.mulf %30, %16 : vector<16x128xf32>
    %32 = vector.shape_cast %31 : vector<16x128xf32> to vector<2x8x128xf32>
    %cst_12 = arith.constant dense<0.000000e+00> : vector<8x128xf32>
    %33 = vector.multi_reduction <add>, %32, %cst_12 [0] : vector<2x8x128xf32> to vector<8x128xf32>
    %c0_13 = arith.constant 0 : index
    %c0_14 = arith.constant 0 : index
    %34 = vector.load %arg3[%c0_13, %c0_14] : memref<8x128xf32, #tpu.memory_space<vmem>>, vector<8x128xf32>
    tpu.vector_store %arg3[%c0_13, %c0_14], %33 {strides = array<i32>} : memref<8x128xf32, #tpu.memory_space<vmem>>, vector<8x128xf32>,
    return
  }
  func.func @transform_0(%arg0: i32) -> (i32, i32) {
    %c0_i32 = arith.constant 0 : i32
    %c0_i32_0 = arith.constant 0 : i32
    return %arg0, %c0_i32 : i32, i32
  }
  func.func @transform_1(%arg0: i32) -> (i32, i32) {
    %c0_i32 = arith.constant 0 : i32
    %c0_i32_0 = arith.constant 0 : i32
    return %arg0, %c0_i32 : i32, i32
  }
  func.func @transform_2(%arg0: i32) -> (i32, i32) {
    %c0_i32 = arith.constant 0 : i32
    %c0_i32_0 = arith.constant 0 : i32
    return %arg0, %c0_i32 : i32, i32
  }
}

</mosaic_0001>

<llo_original>
// kernel: tpu_custom_call.1
$region0: #{tpu_custom_call.1}
  #allocation0 [shape = 'u32[]', space=smem, size = 0x4, offset = 0x4, fixed_abs, tag = 'smem constant byte address 0x4 - core index']
  #allocation1 [shape = 'u32[144,128]{1,0:T(1,128)}', space=vmem, size = 0x12000, scoped, tag = 'internal scratch']
  %s0 = inlined_call_operand.hbm [shape: f32[16,128], index: 0, kind: input, shape index: {}]
  %s1 = inlined_call_operand.hbm [shape: f32[16,128], index: 1, kind: input, shape index: {}]
  %s2 = inlined_call_operand.hbm [shape: f32[8,128], index: 2, kind: output, shape index: {}]
  %s3 = sld [smem:[#allocation0]]
  $region26: #{tpu_custom_call.1} parent=0
    _
  %s5 = ssub.s32 1, %s3
  %s6 = scalar_select 0, %s5, %s3
  $region1: #{tpu_custom_call.1} parent=0
    #allocation2 [shape = 'u8[8192]{0}', space=vmem, size = 0x2000, scoped, tag = 'input window, operand 0, single buffered']
    #allocation3 [shape = 's32[1]{0}', space=sflag, size = 0x4, scoped, tag = 'scoped memory for tpu_custom_call.1']
    #allocation4 [shape = 's32[1]{0}', space=sflag, size = 0x4, scoped, tag = 'scoped memory for tpu_custom_call.1']
    #allocation5 [shape = 'u8[8192]{0}', space=vmem, size = 0x2000, scoped, tag = 'input window, operand 1, single buffered']
    #allocation6 [shape = 's32[1]{0}', space=sflag, size = 0x4, scoped, tag = 'scoped memory for tpu_custom_call.1']
    #allocation7 [shape = 'u8[4096]{0}', space=vmem, size = 0x1000, scoped, tag = 'output window, operand 0, single buffered']
    %7 = vsyncpa [#allocation3], 0
    %8 = vsyncpa [#allocation6], 0
    %9 = vsyncpa [#allocation4], 0
    // Predicated region
    $region2: #{tpu_custom_call.1} parent=1 // pred_check
      _
    $region3: #{tpu_custom_call.1} parent=1 // pred_check_branch
      %11 = sbr.rel (0) target = $region5
    $region4: #{tpu_custom_call.1} parent=1 // pred_region
      %s13 = ssub.s32 256, 256
      %14 = vsyncadd [#allocation3], %s13
      %s15 = sshll.u32 [#allocation2], 4
      %s16 = int_to_ptr.vmem [resolvable:$true] %s15
      %21 = dma.hbm_to_vmem [thread:$0]  %s0, 256, %s16, [#allocation3], 128, 128, 8
    $region5: #{tpu_custom_call.1} parent=1 // pred_fallthru
      _
    // Predicated region
    $region6: #{tpu_custom_call.1} parent=1 // pred_check
      _
    $region7: #{tpu_custom_call.1} parent=1 // pred_check_branch
      %23 = sbr.rel (0) target = $region9
    $region8: #{tpu_custom_call.1} parent=1 // pred_region
      %s25 = ssub.s32 256, 256
      %26 = vsyncadd [#allocation6], %s25
      %s27 = sshll.u32 [#allocation5], 4
      %s28 = int_to_ptr.vmem [resolvable:$true] %s27
      %33 = dma.hbm_to_vmem [thread:$0]  %s1, 256, %s28, [#allocation6], 128, 128, 8
    $region9: #{tpu_custom_call.1} parent=1 // pred_fallthru
      _
    // Predicated region
    $region10: #{tpu_custom_call.1} parent=1 // pred_check
      _
    $region11: #{tpu_custom_call.1} parent=1 // pred_check_branch
      %35 = sbr.rel (0) target = $region13
    $region12: #{tpu_custom_call.1} parent=1 // pred_region
      %36 = dma.done [#allocation3], 256
    $region13: #{tpu_custom_call.1} parent=1 // pred_fallthru
      _
    // Predicated region
    $region14: #{tpu_custom_call.1} parent=1 // pred_check
      _
    $region15: #{tpu_custom_call.1} parent=1 // pred_check_branch
      %38 = sbr.rel (0) target = $region17
    $region16: #{tpu_custom_call.1} parent=1 // pred_region
      %39 = dma.done [#allocation6], 256
    $region17: #{tpu_custom_call.1} parent=1 // pred_fallthru
      _
    %v40 = vld [vmem:[#allocation2] sm:$0xff]
    %v41 = vld [vmem:[#allocation2 + $0x8] sm:$0xff]
    %v42 = vld [vmem:[#allocation5] sm:$0xff]
    %v43 = vld [vmem:[#allocation5 + $0x8] sm:$0xff]
    %v44 = vlog2.pop %v40
    %v45 = vmul.f32 %v44, 0.6931472
    %v46 = vlog2.pop %v41
    %v47 = vmul.f32 %v46, 0.6931472
    %v48 = vmax.f32 %v45, -100.0
    %v49 = vmax.f32 %v47, -100.0
    %v50 = vsub.f32 1.0, %v40
    %v51 = vsub.f32 1.0, %v41
    %v52 = vlog2.pop %v50
    %v53 = vmul.f32 %v52, 0.6931472
    %v54 = vlog2.pop %v51
    %v55 = vmul.f32 %v54, 0.6931472
    %v56 = vmax.f32 %v53, -100.0
    %v57 = vmax.f32 %v55, -100.0
    %v58 = vmul.f32 %v42, %v48
    %v59 = vmul.f32 %v43, %v49
    %v60 = vsub.f32 1.0, %v42
    %v61 = vsub.f32 1.0, %v43
    %v62 = vmul.f32 %v60, %v56
    %v63 = vmul.f32 %v61, %v57
    %v64 = vadd.f32 %v58, %v62
    %v65 = vadd.f32 %v59, %v63
    %v66 = vsub.f32 0.0, %v64
    %v67 = vsub.f32 0.0, %v65
    %v68 = vsub.f32 0.0, %v66
    %v69 = vsub.f32 0.0, %v67
    %v70 = vmul.f32 %v68, 1.442695
    %v71 = vpow.pop %v70
    %v72 = vmul.f32 %v69, 1.442695
    %v73 = vpow.pop %v72
    %v74 = vsub.f32 1.0, %v71
    %v75 = vsub.f32 1.0, %v73
    %v76 = vmul.f32 %v74, %v74
    %v77 = vmul.f32 %v75, %v75
    %v78 = vmul.f32 %v60, 0.0
    %v79 = vmul.f32 %v61, 0.0
    %v80 = vadd.f32 %v42, %v78
    %v81 = vadd.f32 %v43, %v79
    %v82 = vmul.f32 %v80, %v76
    %v83 = vmul.f32 %v81, %v77
    %v84 = vmul.f32 %v82, %v66
    %v85 = vmul.f32 %v83, %v67
    %v86 = vadd.f32 %v84, %v85
    %87 = vst [vmem:[#allocation7] sm:$0xff] %v86
    // Predicated region
    $region18: #{tpu_custom_call.1} parent=1 // pred_check
      _
    $region19: #{tpu_custom_call.1} parent=1 // pred_check_branch
      %89 = sbr.rel (0) target = $region21
    $region20: #{tpu_custom_call.1} parent=1 // pred_region
      %s91 = ssub.s32 128, 128
      %92 = vsyncadd [#allocation4], %s91
      %s94 = sshll.u32 [#allocation7], 4
      %s95 = int_to_ptr.vmem [resolvable:$true] %s94
      %97 = dma.vmem_to_hbm [thread:$0]  %s95, 128, %s2, [#allocation4]
    $region21: #{tpu_custom_call.1} parent=1 // pred_fallthru
      _
    // Predicated region
    $region22: #{tpu_custom_call.1} parent=1 // pred_check
      _
    $region23: #{tpu_custom_call.1} parent=1 // pred_check_branch
      %99 = sbr.rel (0) target = $region25
    $region24: #{tpu_custom_call.1} parent=1 // pred_region
      %100 = dma.done [#allocation4], 128
    $region25: #{tpu_custom_call.1} parent=1 // pred_fallthru
      _
    %101 = vsyncpa [#allocation3], 1
    %102 = vsyncpa [#allocation6], 1
    %103 = vsyncpa [#allocation4], 1

</llo_original>
